<compile_context>
chip_gen: v6e
topology: v6e:2x2x1
jax: 0.10.0
libtpu: 0.0.40
codegen_flags: <defaults>
</compile_context>

<pallas_src>
import functools

import jax
import jax.numpy as jnp
from jax.experimental import pallas as pl
from jax.experimental.pallas import tpu as pltpu


# ---------------------------------------------------------------------------
# Kernels
# ---------------------------------------------------------------------------
def _rmsnorm_kernel(x_ref, w_ref, o_ref, *, eps, inv_d):
    x = x_ref[...].astype(jnp.float32)                        # (tile_rows, d_pad)
    # Padded lanes are zero, so sum is exact; divide by the TRUE feature dim.
    ms = jnp.sum(x * x, axis=-1, keepdims=True) * inv_d       # (tile_rows, 1)
    inv = jax.lax.rsqrt(ms + eps)                              # EUP
    o_ref[...] = (x * inv * w_ref[...]).astype(o_ref.dtype)   # w already f32


def _gated_rmsnorm_kernel(x_ref, z_ref, w_ref, o_ref, *, eps, inv_d,
                          native_elementwise):
    if native_elementwise:
        # bf16 VPU/EUP path (v6e / v7x): gate in native dtype, accumulate in f32.
        z = z_ref[...]
        g = (x_ref[...] * (z * jax.nn.sigmoid(z))).astype(jnp.float32)
    else:
        x = x_ref[...].astype(jnp.float32)
        z = z_ref[...].astype(jnp.float32)
        g = x * (z * jax.nn.sigmoid(z))                        # x * silu(z)
    ms = jnp.sum(g * g, axis=-1, keepdims=True) * inv_d        # f32 accumulation
    inv = jax.lax.rsqrt(ms + eps)
    o_ref[...] = (g * inv * w_ref[...]).astype(o_ref.dtype)


# ---------------------------------------------------------------------------
# Generation-aware sizing
# ---------------------------------------------------------------------------
def _tpu_generation_config():
    """Pick VMEM tiling budget / limit, row cap and feature flags per TPU gen."""
    vmem_phys = 128 * 1024 * 1024
    try:
        vmem_phys = int(pltpu.get_tpu_info().vmem_capacity_bytes)
    except Exception:
        pass
    kind = ""
    try:
        kind = jax.devices()[0].device_kind.lower()
    except Exception:
        pass

    if vmem_phys <= 96 * 1024 * 1024 or "v7" in kind or "7x" in kind:
        # v7x: 64 MiB physical VMEM, 2 TensorCores, 3.2 TB/s HBM, bf16 VPU.
        return dict(budget=20 << 20, vmem_limit=48 << 20, row_cap=1024,
                    bf16_vpu=True, input_bufs=3)
    if "v5" in kind:
        # v5e: 128 MiB VMEM, most HBM-bound; >512-row tiles give no further win.
        return dict(budget=40 << 20, vmem_limit=80 << 20, row_cap=512,
                    bf16_vpu=False, input_bufs=2)
    # v6e (default for other 128-MiB parts): bf16 VPU/EUP available.
    return dict(budget=44 << 20, vmem_limit=96 << 20, row_cap=1024,
                bf16_vpu=True, input_bufs=2)


def _choose_tile_rows(rows, d_pad, dtype_bytes, gated, *, budget, row_cap, in_bufs):
    """Row tile: dtype-aware sublane multiple, sized to the VMEM budget, with
    at least 2 grid steps when possible (so v7x can shard across both TCs)."""
    if dtype_bytes >= 4:
        sub = 8
    elif dtype_bytes == 2:
        sub = 16
    else:
        sub = 32
    n_in = 2 if gated else 1
    f32_temps = 4 if gated else 2          # gated path materializes more f32 temps
    bytes_per_row = d_pad * ((n_in * in_bufs + 2) * dtype_bytes + f32_temps * 4)
    tile = budget // max(bytes_per_row, 1)
    tile = min(tile, row_cap)              # amortizes ~0.35us per-step overhead
    tile = max(sub, (tile // sub) * sub)

    rows_rounded = ((rows + sub - 1) // sub) * sub
    if rows_rounded >= 2 * sub:
        # Guarantee >=2 grid steps so "parallel" can use both v7x TensorCores.
        half = ((rows_rounded // 2 + sub - 1) // sub) * sub
        tile = min(tile, half)
    return min(tile, rows_rounded)


# ---------------------------------------------------------------------------
# Wrapper
# ---------------------------------------------------------------------------
def rms_norm(x, weight, z=None, eps=1e-5, tile_rows=None, vmem_limit_bytes=None):
    """Gated RMSNorm. x (and optional z): [..., d]; weight: [d]."""
    orig_shape = x.shape
    d = orig_shape[-1]
    gated = z is not None
    dtype_bytes = jnp.dtype(x.dtype).itemsize

    cfg = _tpu_generation_config()
    if vmem_limit_bytes is None:
        vmem_limit_bytes = cfg["vmem_limit"]

    # Lane-dense feature axis: pad d to a multiple of 128 (zero pads are exact for
    # the square-sum because we divide by the true d; padded output lanes are 0
    # and sliced off). Production hidden sizes are usually already 128-aligned.
    d_pad = d if d % 128 == 0 else ((d + 127) // 128) * 128

    x2 = x.reshape(-1, d)
    rows = x2.shape[0]
    w2 = weight.astype(jnp.float32).reshape(1, d)    # cast once, outside the grid loop
    if d_pad != d:
        x2 = jnp.pad(x2, ((0, 0), (0, d_pad - d)))
        w2 = jnp.pad(w2, ((0, 0), (0, d_pad - d)))
    z2 = None
    if gated:
        z2 = z.reshape(-1, d)
        if d_pad != d:
            z2 = jnp.pad(z2, ((0, 0), (0, d_pad - d)))

    if tile_rows is None:
        tile_rows = _choose_tile_rows(rows, d_pad, dtype_bytes, gated,
                                      budget=cfg["budget"],
                                      row_cap=cfg["row_cap"],
                                      in_bufs=cfg["input_bufs"])

    grid = (pl.cdiv(rows, tile_rows),)          # ragged last block masked by Pallas
    idx = lambda i: (i, 0)
    if cfg["input_bufs"] != 2:
        in_row_spec = pl.BlockSpec((tile_rows, d_pad), idx,
                                   pipeline_mode=pl.Buffered(cfg["input_bufs"]))
    else:
        in_row_spec = pl.BlockSpec((tile_rows, d_pad), idx)
    out_row_spec = pl.BlockSpec((tile_rows, d_pad), idx)
    w_spec = pl.BlockSpec((1, d_pad), lambda i: (0, 0))
    out_shape = jax.ShapeDtypeStruct((rows, d_pad), x.dtype)

    n_streams = (2 if gated else 1) + 1          # row inputs + output (HBM passes)
    cost = pl.CostEstimate(
        flops=rows * d_pad * (8 if gated else 4),
        transcendentals=(rows * (d_pad + 1)) if gated else rows,
        bytes_accessed=n_streams * rows * d_pad * dtype_bytes + d_pad * 4,
    )
    cparams = pltpu.CompilerParams(
        dimension_semantics=("parallel",),
        vmem_limit_bytes=vmem_limit_bytes,
    )

    native = gated and cfg["bf16_vpu"] and x.dtype == jnp.bfloat16
    if not gated:
        kernel = functools.partial(_rmsnorm_kernel, eps=eps, inv_d=1.0 / d)
        in_specs = [in_row_spec, w_spec]
        args = (x2, w2)
    else:
        kernel = functools.partial(_gated_rmsnorm_kernel, eps=eps, inv_d=1.0 / d,
                                   native_elementwise=native)
        in_specs = [in_row_spec, in_row_spec, w_spec]
        args = (x2, z2, w2)

    out = pl.pallas_call(
        kernel,
        out_shape=out_shape,
        grid_spec=pltpu.PrefetchScalarGridSpec(
            num_scalar_prefetch=0,
            grid=grid,
            in_specs=in_specs,
            out_specs=out_row_spec,
        ),
        compiler_params=cparams,
        cost_estimate=cost,
    )(*args)

    if d_pad != d:
        out = out[:, :d]
    return out.reshape(orig_shape)


# ---------------------------------------------------------------------------
# Reference + tests
# ---------------------------------------------------------------------------
def _reference(x, weight, z=None, eps=1e-5):
    x = x.astype(jnp.float32)
    if z is not None:
        z = z.astype(jnp.float32)
        x = x * (z * jax.nn.sigmoid(z))
    ms = jnp.mean(x * x, axis=-1, keepdims=True)
    return x * jax.lax.rsqrt(ms + eps) * weight.astype(jnp.float32)


if __name__ == "__main__":
    key = jax.random.PRNGKey(0)
    k1, k2, k3, k4, k5 = jax.random.split(key, 5)

    # --- case 1: small f32 shape like the original module test (batch=2, seq=8, d=32) ---
    batch, seq, d = 2, 8, 32
    x = jax.random.normal(k1, (batch, seq, d), dtype=jnp.float32)
    z = jax.random.normal(k2, (batch, seq, d), dtype=jnp.float32)
    weight = jnp.ones((d,), dtype=jnp.float32)   # nn.Parameter(torch.ones(d))

    out_gated = jax.block_until_ready(rms_norm(x, weight, z=z))
    assert jnp.allclose(out_gated, _reference(x, weight, z=z), atol=1e-5, rtol=1e-5)

    out_plain = jax.block_until_ready(rms_norm(x, weight, z=None))
    assert jnp.allclose(out_plain, _reference(x, weight, z=None), atol=1e-5, rtol=1e-5)

    # --- case 2: ragged row count (rows not a multiple of the tile), lane-dense d=128 ---
    d2 = 128
    x2 = jax.random.normal(k3, (3, 7, d2), dtype=jnp.float32)   # rows = 21
    z2 = jax.random.normal(k4, (3, 7, d2), dtype=jnp.float32)
    w2 = jnp.ones((d2,), dtype=jnp.float32)
    out2 = jax.block_until_ready(rms_norm(x2, w2, z=z2))
    assert jnp.allclose(out2, _reference(x2, w2, z=z2), atol=1e-5, rtol=1e-5)

    # --- case 3: bf16 inputs (native bf16 gating on v6e/v7x, f32 accumulation) ---
    x3 = jax.random.normal(k5, (2, 8, d2), dtype=jnp.float32).astype(jnp.bfloat16)
    z3 = jax.random.normal(k2, (2, 8, d2), dtype=jnp.float32).astype(jnp.bfloat16)
    w3 = jnp.ones((d2,), dtype=jnp.float32)
    out3 = jax.block_until_ready(rms_norm(x3, w3, z=z3))
    ref3 = _reference(x3, w3, z=z3).astype(jnp.bfloat16)
    assert jnp.allclose(out3.astype(jnp.float32), ref3.astype(jnp.float32),
                        atol=3e-2, rtol=3e-2)

    print("KERNEL_OK")
</pallas_src>

<mosaic_0001>
module attributes {stable_mosaic.version = 11 : i64} {
  func.func @_gated_rmsnorm_kernel(%arg0: i32, %arg1: memref<8x128xf32, #tpu.memory_space<vmem>>, %arg2: memref<8x128xf32, #tpu.memory_space<vmem>>, %arg3: memref<1x128xf32, #tpu.memory_space<vmem>>, %arg4: memref<8x128xf32, #tpu.memory_space<vmem>>) attributes {dimension_semantics = [#tpu.dimension_semantics<parallel>], iteration_bounds = array<i64: 2>, scalar_prefetch = 0 : i64, scratch_operands = 0 : i64, tpu.core_type = #tpu.core_type<tc>, window_params = [{transform_indices = @transform_0, window_bounds = array<i64: 8, 128>}, {transform_indices = @transform_1, window_bounds = array<i64: 8, 128>}, {pipeline_mode = #tpu.pipeline_mode<synchronous>, transform_indices = @transform_2, window_bounds = array<i64: 1, 128>}, {transform_indices = @transform_3, window_bounds = array<i64: 8, 128>}]} {
    %c0 = arith.constant 0 : index
    %c0_0 = arith.constant 0 : index
    %0 = vector.load %arg1[%c0, %c0_0] : memref<8x128xf32, #tpu.memory_space<vmem>>, vector<8x128xf32>
    %c0_1 = arith.constant 0 : index
    %c0_2 = arith.constant 0 : index
    %1 = vector.load %arg2[%c0_1, %c0_2] : memref<8x128xf32, #tpu.memory_space<vmem>>, vector<8x128xf32>
    %2 = arith.negf %1 : vector<8x128xf32>
    %3 = math.exp %2 : vector<8x128xf32>
    %cst = arith.constant 1.000000e+00 : f32
    %4 = vector.broadcast %cst : f32 to vector<8x128xf32>
    %5 = arith.addf %4, %3 : vector<8x128xf32>
    %6 = arith.divf %4, %5 : vector<8x128xf32>
    %7 = arith.mulf %1, %6 : vector<8x128xf32>
    %8 = arith.mulf %0, %7 : vector<8x128xf32>
    %9 = arith.mulf %8, %8 : vector<8x128xf32>
    %cst_3 = arith.constant dense<0.000000e+00> : vector<8xf32>
    %10 = vector.multi_reduction <add>, %9, %cst_3 [1] : vector<8x128xf32> to vector<8xf32>
    %11 = vector.shape_cast %10 : vector<8xf32> to vector<8x1xf32>
    %cst_4 = arith.constant 3.125000e-02 : f32
    %12 = vector.broadcast %cst_4 : f32 to vector<8x1xf32>
    %13 = arith.mulf %11, %12 : vector<8x1xf32>
    %cst_5 = arith.constant 9.99999974E-6 : f32
    %14 = vector.broadcast %cst_5 : f32 to vector<8x1xf32>
    %15 = arith.addf %13, %14 : vector<8x1xf32>
    %16 = math.rsqrt %15 : vector<8x1xf32>
    %17 = vector.broadcast %16 : vector<8x1xf32> to vector<8x128xf32>
    %18 = arith.mulf %8, %17 : vector<8x128xf32>
    %c0_6 = arith.constant 0 : index
    %c0_7 = arith.constant 0 : index
    %19 = vector.load %arg3[%c0_6, %c0_7] : memref<1x128xf32, #tpu.memory_space<vmem>>, vector<1x128xf32>
    %20 = vector.broadcast %19 : vector<1x128xf32> to vector<8x128xf32>
    %21 = arith.mulf %18, %20 : vector<8x128xf32>
    %c0_8 = arith.constant 0 : index
    %c0_9 = arith.constant 0 : index
    %22 = vector.load %arg4[%c0_8, %c0_9] : memref<8x128xf32, #tpu.memory_space<vmem>>, vector<8x128xf32>
    tpu.vector_store %arg4[%c0_8, %c0_9], %21 {strides = array<i32>} : memref<8x128xf32, #tpu.memory_space<vmem>>, vector<8x128xf32>,
    return
  }
  func.func @transform_0(%arg0: i32) -> (i32, i32) {
    %c0_i32 = arith.constant 0 : i32
    %c0_i32_0 = arith.constant 0 : i32
    return %arg0, %c0_i32 : i32, i32
  }
  func.func @transform_1(%arg0: i32) -> (i32, i32) {
    %c0_i32 = arith.constant 0 : i32
    %c0_i32_0 = arith.constant 0 : i32
    return %arg0, %c0_i32 : i32, i32
  }
  func.func @transform_2(%arg0: i32) -> (i32, i32) {
    %c0_i32 = arith.constant 0 : i32
    %c0_i32_0 = arith.constant 0 : i32
    %c0_i32_1 = arith.constant 0 : i32
    return %c0_i32, %c0_i32_0 : i32, i32
  }
  func.func @transform_3(%arg0: i32) -> (i32, i32) {
    %c0_i32 = arith.constant 0 : i32
    %c0_i32_0 = arith.constant 0 : i32
    return %arg0, %c0_i32 : i32, i32
  }
}

</mosaic_0001>

<llo_original>
// kernel: tpu_custom_call.1
$region0: #{tpu_custom_call.1}
  #allocation0 [shape = 'u32[]', space=smem, size = 0x4, offset = 0x4, fixed_abs, tag = 'smem constant byte address 0x4 - core index']
  #allocation1 [shape = 'u32[144,128]{1,0:T(1,128)}', space=vmem, size = 0x12000, scoped, tag = 'internal scratch']
  %s0 = inlined_call_operand.hbm [shape: f32[16,128], index: 0, kind: input, shape index: {}]
  %s1 = inlined_call_operand.hbm [shape: f32[16,128], index: 1, kind: input, shape index: {}]
  %s2 = inlined_call_operand.vmem [shape: f32[1,128], index: 2, kind: input, shape index: {}]
  %s3 = inlined_call_operand.hbm [shape: f32[16,128], index: 3, kind: output, shape index: {}]
  %s4 = sld [smem:[#allocation0]]
  $region53: #{tpu_custom_call.1} parent=0
    _
  %s6 = ssub.s32 1, %s4
  %s7 = scalar_select 0, %s6, %s4
  $region1: #{tpu_custom_call.1} parent=0
    #allocation2 [shape = 'u8[8192]{0}', space=vmem, size = 0x2000, scoped, tag = 'input window, operand 0']
    #allocation3 [shape = 's32[2]{0}', space=sflag, size = 0x8, scoped, tag = 'scoped memory for tpu_custom_call.1']
    #allocation4 [shape = 's32[2]{0}', space=sflag, size = 0x8, scoped, tag = 'scoped memory for tpu_custom_call.1']
    #allocation5 [shape = 'u8[8192]{0}', space=vmem, size = 0x2000, scoped, tag = 'input window, operand 1']
    #allocation6 [shape = 's32[2]{0}', space=sflag, size = 0x8, scoped, tag = 'scoped memory for tpu_custom_call.1']
    #allocation7 [shape = 'u8[8192]{0}', space=vmem, size = 0x2000, scoped, tag = 'output window, operand 0']
    %8 = vsyncpa [#allocation3], 0
    %s9 = scalar_lea.sflag [#allocation3], 1
    %10 = vsyncpa %s9, 0
    %11 = vsyncpa [#allocation6], 0
    %s12 = scalar_lea.sflag [#allocation6], 1
    %13 = vsyncpa %s12, 0
    %14 = vsyncpa [#allocation4], 0
    %s15 = scalar_lea.sflag [#allocation4], 1
    %16 = vsyncpa %s15, 0
    loop: start=0, step=1, limit=4
    $region2: #{tpu_custom_call.1} parent=1 // loop_pre_header
      _
    $region3: #{tpu_custom_call.1} parent=1 // loop_header
      %s18 = sphi 0, %s22
      %p19 = scmp.ge.s32.totalorder %s18, 4
      %s28 = sphi 0, %s30
      %s31 = sphi 0, %s28
      %s32 = sphi 0, %s31
      %s48 = sphi 0, %s32
      %s54 = sphi 0, %s56
      %s57 = sphi 0, %s54
      %s58 = sphi 0, %s57
      %s74 = sphi 0, %s58
      %s78 = sphi 0, %s78
      %s80 = sphi 0, %s78
      %s81 = sphi 0, %s80
      %s95 = sphi 0, %s81
      %s101 = sphi 0, %s103
      %s104 = sphi 0, %s101
      %s105 = sphi 0, %s104
      %s121 = sphi 0, %s105
    $region4: #{tpu_custom_call.1} parent=1 // loop_header_branch
      %21 = sbr.rel (%p19) target = $region8
    $region5: #{tpu_custom_call.1} parent=1 // loop_body
      %s23 = ssub.s32 %s18, 1
      %s24 = ssub.s32 %s18, 2
      %s25 = sadd.s32 %s18, 1
      %s26 = ssub.s32 %s18, %s25
      %p27 = scmp.eq.s32.totalorder %s26, 0
      %s29 = sadd.s32 %s28, 1
      %s30 = scalar_select %p27, %s28, %s29
      %p33 = pneg %p27
      %p34 = scmp.eq.s32.totalorder %s18, 1
      %p35 = por %p33, %p34
      %p36 = scmp.ne.s32.totalorder %s28, %s31
      %p37 = scmp.eq.s32.totalorder %s18, 0
      %p38 = por %p36, %p37
      %p39 = scmp.ne.s32.totalorder %s28, %s31
      %p40 = scmp.eq.s32.totalorder %s23, 1
      %p41 = por %p39, %p40
      %p42 = scmp.ne.s32.totalorder %s31, %s32
      %p43 = scmp.eq.s32.totalorder %s23, 0
      %p44 = por %p42, %p43
      %p45 = scmp.ne.s32.totalorder %s31, %s32
      %p46 = scmp.eq.s32.totalorder %s24, 1
      %p47 = por %p45, %p46
      %p49 = scmp.ne.s32.totalorder %s32, %s48
      %p50 = scmp.eq.s32.totalorder %s24, 0
      %p51 = por %p49, %p50
      %s52 = ssub.s32 %s18, %s25
      %p53 = scmp.eq.s32.totalorder %s52, 0
      %s55 = sadd.s32 %s54, 1
      %s56 = scalar_select %p53, %s54, %s55
      %p59 = pneg %p53
      %p60 = scmp.eq.s32.totalorder %s18, 1
      %p61 = por %p59, %p60
      %p62 = scmp.ne.s32.totalorder %s54, %s57
      %p63 = scmp.eq.s32.totalorder %s18, 0
      %p64 = por %p62, %p63
      %p65 = scmp.ne.s32.totalorder %s54, %s57
      %p66 = scmp.eq.s32.totalorder %s23, 1
      %p67 = por %p65, %p66
      %p68 = scmp.ne.s32.totalorder %s57, %s58
      %p69 = scmp.eq.s32.totalorder %s23, 0
      %p70 = por %p68, %p69
      %p71 = scmp.ne.s32.totalorder %s57, %s58
      %p72 = scmp.eq.s32.totalorder %s24, 1
      %p73 = por %p71, %p72
      %p75 = scmp.ne.s32.totalorder %s58, %s74
      %p76 = scmp.eq.s32.totalorder %s24, 0
      %p77 = por %p75, %p76
      %s79 = sadd.s32 %s78, 1
      %p82 = scmp.eq.s32.totalorder %s18, 1
      %p83 = scmp.ne.s32.totalorder %s78, %s80
      %p84 = scmp.eq.s32.totalorder %s18, 0
      %p85 = por %p83, %p84
      %p86 = scmp.ne.s32.totalorder %s78, %s80
      %p87 = scmp.eq.s32.totalorder %s23, 1
      %p88 = por %p86, %p87
      %p89 = scmp.ne.s32.totalorder %s80, %s81
      %p90 = scmp.eq.s32.totalorder %s23, 0
      %p91 = por %p89, %p90
      %p92 = scmp.ne.s32.totalorder %s80, %s81
      %p93 = scmp.eq.s32.totalorder %s24, 1
      %p94 = por %p92, %p93
      %p96 = scmp.ne.s32.totalorder %s81, %s95
      %p97 = scmp.eq.s32.totalorder %s24, 0
      %p98 = por %p96, %p97
      %s99 = ssub.s32 %s18, %s25
      %p100 = scmp.eq.s32.totalorder %s99, 0
      %s102 = sadd.s32 %s101, 1
      %s103 = scalar_select %p100, %s101, %s102
      %p106 = pneg %p100
      %p107 = scmp.eq.s32.totalorder %s18, 1
      %p108 = por %p106, %p107
      %p109 = scmp.ne.s32.totalorder %s101, %s104
      %p110 = scmp.eq.s32.totalorder %s18, 0
      %p111 = por %p109, %p110
      %p112 = scmp.ne.s32.totalorder %s101, %s104
      %p113 = scmp.eq.s32.totalorder %s23, 1
      %p114 = por %p112, %p113
      %p115 = scmp.ne.s32.totalorder %s104, %s105
      %p116 = scmp.eq.s32.totalorder %s23, 0
      %p117 = por %p115, %p116
      %p118 = scmp.ne.s32.totalorder %s104, %s105
      %p119 = scmp.eq.s32.totalorder %s24, 1
      %p120 = por %p118, %p119
      %p122 = scmp.ne.s32.totalorder %s105, %s121
      %p123 = scmp.eq.s32.totalorder %s24, 0
      %p124 = por %p122, %p123
      %p125 = scmp.le.s32.totalorder 1, %s18
      %p126 = scmp.lt.s32.totalorder %s18, 3
      %p127 = pnand %p125, %p126
      %p128 = pneg %p127
      // Predicated region
      $region9: #{tpu_custom_call.1} parent=5 // pred_check
        _
      $region10: #{tpu_custom_call.1} parent=5 // pred_check_branch
        %130 = sbr.rel (%p127) target = $region12
      $region11: #{tpu_custom_call.1} parent=5 // pred_region
        %s131 = ssub.s32 %s18, 1
        // Predicated region
        $region13: #{tpu_custom_call.1} parent=11 // pred_check
          %p132 = pneg %p91
        $region14: #{tpu_custom_call.1} parent=11 // pred_check_branch
          %134 = sbr.rel (%p132) target = $region16
        $region15: #{tpu_custom_call.1} parent=11 // pred_region
          _
        $region16: #{tpu_custom_call.1} parent=11 // pred_fallthru
          _
      $region12: #{tpu_custom_call.1} parent=5 // pred_fallthru
        _
      %p135 = scmp.lt.s32.totalorder %s18, 2
      // Predicated region
      $region17: #{tpu_custom_call.1} parent=5 // pred_check
        %p136 = pneg %p135
      $region18: #{tpu_custom_call.1} parent=5 // pred_check_branch
        %138 = sbr.rel (%p136) target = $region20
      $region19: #{tpu_custom_call.1} parent=5 // pred_region
        // Predicated region
        $region21: #{tpu_custom_call.1} parent=19 // pred_check
          %p139 = pneg %p38
        $region22: #{tpu_custom_call.1} parent=19 // pred_check_branch
          %141 = sbr.rel (%p139) target = $region24
        $region23: #{tpu_custom_call.1} parent=19 // pred_region
          %s142 = sand.u32 %s28, 1
          %s143 = scalar_lea.sflag [#allocation3], %s142
          %s144 = sand.u32 %s28, 1
          %s145 = smul.addr %s144, 8
          %s146 = scalar_lea.vmem [#allocation2], %s145
          %s148 = ssub.s32 128, 128
          %149 = vsyncadd %s143, %s148
          %s150 = smul.addr %s18, 128
          %s151 = scalar_lea.hbm %s0, %s150
          %s153 = sshll.u32 %s146, 4
          %s154 = int_to_ptr.vmem [resolvable:$true] %s153
          %156 = dma.hbm_to_vmem [thread:$0]  %s151, 128, %s154, %s143
        $region24: #{tpu_custom_call.1} parent=19 // pred_fallthru
          _
        // Predicated region
        $region25: #{tpu_custom_call.1} parent=19 // pred_check
          %p157 = pneg %p64
        $region26: #{tpu_custom_call.1} parent=19 // pred_check_branch
          %159 = sbr.rel (%p157) target = $region28
        $region27: #{tpu_custom_call.1} parent=19 // pred_region
          %s160 = sand.u32 %s54, 1
          %s161 = scalar_lea.sflag [#allocation6], %s160
          %s162 = sand.u32 %s54, 1
          %s163 = smul.addr %s162, 8
          %s164 = scalar_lea.vmem [#allocation5], %s163
          %s166 = ssub.s32 128, 128
          %167 = vsyncadd %s161, %s166
          %s168 = smul.addr %s18, 128
          %s169 = scalar_lea.hbm %s1, %s168
          %s171 = sshll.u32 %s164, 4
          %s172 = int_to_ptr.vmem [resolvable:$true] %s171
          %174 = dma.hbm_to_vmem [thread:$0]  %s169, 128, %s172, %s161
        $region28: #{tpu_custom_call.1} parent=19 // pred_fallthru
          _
      $region20: #{tpu_custom_call.1} parent=5 // pred_fallthru
        _
      %p175 = scmp.le.s32.totalorder 1, %s18
      %p176 = scmp.lt.s32.totalorder %s18, 3
      %p177 = pnand %p175, %p176
      %p178 = pneg %p177
      // Predicated region
      $region29: #{tpu_custom_call.1} parent=5 // pred_check
        _
      $region30: #{tpu_custom_call.1} parent=5 // pred_check_branch
        %180 = sbr.rel (%p177) target = $region32
      $region31: #{tpu_custom_call.1} parent=5 // pred_region
        %s181 = ssub.s32 %s18, 1
        %s182 = sand.u32 %s31, 1
        %s183 = scalar_lea.sflag [#allocation3], %s182
        %s184 = sand.u32 %s31, 1
        %s185 = smul.addr %s184, 8
        %s186 = scalar_lea.vmem [#allocation2], %s185
        // Predicated region
        $region33: #{tpu_custom_call.1} parent=31 // pred_check
          %p187 = pneg %p44
        $region34: #{tpu_custom_call.1} parent=31 // pred_check_branch
          %189 = sbr.rel (%p187) target = $region36
        $region35: #{tpu_custom_call.1} parent=31 // pred_region
          %190 = dma.done %s183, 128
        $region36: #{tpu_custom_call.1} parent=31 // pred_fallthru
          _
        %s191 = sand.u32 %s57, 1
        %s192 = scalar_lea.sflag [#allocation6], %s191
        %s193 = sand.u32 %s57, 1
        %s194 = smul.addr %s193, 8
        %s195 = scalar_lea.vmem [#allocation5], %s194
        // Predicated region
        $region37: #{tpu_custom_call.1} parent=31 // pred_check
          %p196 = pneg %p70
        $region38: #{tpu_custom_call.1} parent=31 // pred_check_branch
          %198 = sbr.rel (%p196) target = $region40
        $region39: #{tpu_custom_call.1} parent=31 // pred_region
          %199 = dma.done %s192, 128
        $region40: #{tpu_custom_call.1} parent=31 // pred_fallthru
          _
        %s200 = sand.u32 %s31, 1
        %s201 = scalar_lea.sflag [#allocation3], %s200
        %s202 = sand.u32 %s31, 1
        %s203 = smul.addr %s202, 8
        %s204 = scalar_lea.vmem [#allocation2], %s203
        %p205 = pneg %p44
        %p206 = pneg %p41
        %s207 = sand.u32 %s57, 1
        %s208 = scalar_lea.sflag [#allocation6], %s207
        %s209 = sand.u32 %s57, 1
        %s210 = smul.addr %s209, 8
        %s211 = scalar_lea.vmem [#allocation5], %s210
        %p212 = pneg %p70
        %p213 = pneg %p67
        %p214 = pneg %p91
        %p215 = pneg %p88
        %p216 = pneg %p117
        %p217 = pneg %p114
        %s218 = sand.u32 %s104, 1
        %s219 = scalar_lea.sflag [#allocation4], %s218
        %s220 = sand.u32 %s104, 1
        %s221 = smul.addr %s220, 8
        %s222 = scalar_lea.vmem [#allocation7], %s221
        %v223 = vld [vmem:[%s186] sm:$0xff]
        %v224 = vld [vmem:[%s195] sm:$0xff]
        %v225 = vxor.u32 %v224, 2147483648
        %v226 = vmul.f32 %v225, 1.442695
        %v227 = vpow.pop %v226
        %v228 = vadd.f32 %v227, 1.0
        %v229 = vrcp.pop %v228
        %v230 = vmul.f32 1.0, %v229
        %v231 = vmul.f32 %v224, %v230
        %v232 = vmul.f32 %v223, %v231
        %v233 = vmul.f32 %v232, %v232
        %234 = vadd.xlane.f32.xlu0 %v233
        %v235 = vpop.xlane.xlu0 %234
        %v236 = vmul.f32 %v235, 0.03125
        %v237 = vadd.f32 %v236, 1e-05
        %v238 = vrsqrt.pop %v237
        %v239 = vmul.f32 %v232, %v238
        %v240 = vld [vmem:[%s2] sm:$0x1]
        %v242 = vlaneseq
        %v243 = vshrl.u32 %v242, 7
        %v244 = vsub.s32 0, %v243
        %v245 = vrot.slane %v240, %v244
        %v247 = vmul.f32 %v239, %v245
        %248 = vst [vmem:[%s222] sm:$0xff] %v247
        %s249 = sand.u32 %s104, 1
        %s250 = scalar_lea.sflag [#allocation4], %s249
        %s251 = sand.u32 %s104, 1
        %s252 = smul.addr %s251, 8
        %s253 = scalar_lea.vmem [#allocation7], %s252
        // Predicated region
        $region41: #{tpu_custom_call.1} parent=31 // pred_check
          %p254 = pneg %p114
        $region42: #{tpu_custom_call.1} parent=31 // pred_check_branch
          %256 = sbr.rel (%p254) target = $region44
        $region43: #{tpu_custom_call.1} parent=31 // pred_region
          %s258 = ssub.s32 128, 128
          %259 = vsyncadd %s250, %s258
          %s260 = smul.addr %s23, 128
          %s261 = scalar_lea.hbm %s3, %s260
          %s263 = sshll.u32 %s253, 4
          %s264 = int_to_ptr.vmem [resolvable:$true] %s263
          %266 = dma.vmem_to_hbm [thread:$0]  %s264, 128, %s261, %s250
        $region44: #{tpu_custom_call.1} parent=31 // pred_fallthru
          _
      $region32: #{tpu_custom_call.1} parent=5 // pred_fallthru
        _
      %p267 = scmp.le.s32.totalorder 2, %s18
      // Predicated region
      $region45: #{tpu_custom_call.1} parent=5 // pred_check
        %p268 = pneg %p267
      $region46: #{tpu_custom_call.1} parent=5 // pred_check_branch
        %270 = sbr.rel (%p268) target = $region48
      $region47: #{tpu_custom_call.1} parent=5 // pred_region
        %s271 = ssub.s32 %s18, 2
        // Predicated region
        $region49: #{tpu_custom_call.1} parent=47 // pred_check
          %p272 = pneg %p120
        $region50: #{tpu_custom_call.1} parent=47 // pred_check_branch
          %274 = sbr.rel (%p272) target = $region52
        $region51: #{tpu_custom_call.1} parent=47 // pred_region
          %s275 = sand.u32 %s105, 1
          %s276 = scalar_lea.sflag [#allocation4], %s275
          %s277 = sand.u32 %s105, 1
          %s278 = smul.addr %s277, 8
          %s279 = scalar_lea.vmem [#allocation7], %s278
          %280 = dma.done %s276, 128
        $region52: #{tpu_custom_call.1} parent=47 // pred_fallthru
          _
      $region48: #{tpu_custom_call.1} parent=5 // pred_fallthru
        _
    $region6: #{tpu_custom_call.1} parent=1 // loop_footer
      %s22 = sadd.s32 1, %s18
    $region7: #{tpu_custom_call.1} parent=1 // loop_footer_branch
      %17 = sbr.rel target = $region3
    $region8: #{tpu_custom_call.1} parent=1 // loop_exit
      _
    %281 = vsyncpa [#allocation3], 1
    %s282 = scalar_lea.sflag [#allocation3], 1
    %283 = vsyncpa %s282, 1
    %284 = vsyncpa [#allocation6], 1
    %s285 = scalar_lea.sflag [#allocation6], 1
    %286 = vsyncpa %s285, 1
    %287 = vsyncpa [#allocation4], 1
    %s288 = scalar_lea.sflag [#allocation4], 1
    %289 = vsyncpa %s288, 1

</llo_original>
